<compile_context>
chip_gen: v5e
topology: v5e:2x2
jax: 0.10.0
libtpu: 0.0.40
codegen_flags: <defaults>
</compile_context>

<pallas_src>
import jax
import jax.numpy as jnp
from jax import lax
from jax.experimental import pallas as pl
from jax.experimental.pallas import tpu as pltpu

_NORM_EPS = 1e-12   # F.normalize default eps
_COS_EPS = 1e-8     # F.cosine_similarity default eps


def _similarity_kernel(x1_ref, x2_ref, wsq_ref, o_ref):
    x1 = x1_ref[...].astype(jnp.float32)            # (TB, D)
    x2 = x2_ref[...].astype(jnp.float32)            # (TB, D)
    wsq = wsq_ref[...].astype(jnp.float32)          # (1, D) = feature_weights**2

    # Per-element products (VPU); w*w folded into the reductions so the
    # weighted tensors w1/w2 are never materialized.
    x1sq = x1 * x1
    x2sq = x2 * x2
    x12 = x1 * x2

    # Five lane reductions -> (TB, 1) row scalars.
    s1 = jnp.sum(x1sq, axis=-1, keepdims=True)              # ||x1||^2
    s2 = jnp.sum(x2sq, axis=-1, keepdims=True)              # ||x2||^2
    sw1 = jnp.sum(x1sq * wsq, axis=-1, keepdims=True)       # sum(w^2 * x1^2)
    sw2 = jnp.sum(x2sq * wsq, axis=-1, keepdims=True)       # sum(w^2 * x2^2)
    sw12 = jnp.sum(x12 * wsq, axis=-1, keepdims=True)       # sum(w^2 * x1*x2)

    # F.normalize(x, p=2, dim=-1): x / max(||x||, 1e-12)
    #   -> per-row scale r = rsqrt(max(||x||^2, 1e-24))   (exact same clamp)
    r1 = lax.rsqrt(jnp.maximum(s1, _NORM_EPS * _NORM_EPS))
    r2 = lax.rsqrt(jnp.maximum(s2, _NORM_EPS * _NORM_EPS))

    # cosine_similarity(w*x1n, w*x2n):
    #   num = r1*r2*sw12,   ||w*x1n|| = r1*sqrt(sw1),   ||w*x2n|| = r2*sqrt(sw2)
    d1 = r1 * jnp.sqrt(sw1)
    d2 = r2 * jnp.sqrt(sw2)
    num = (r1 * r2) * sw12
    den = jnp.maximum(d1 * d2, _COS_EPS)
    o_ref[...] = num * pl.reciprocal(den, approx=False)


def _choose_tile(B, D, itemsize):
    """Pick a row tile from a conservative VMEM budget (safe on v5e/v6e/v7x)."""
    # sublane alignment: 8 rows for f32, 16 for bf16, 32 for int8
    align = 8 * max(1, 4 // itemsize)
    b_ceil = pl.cdiv(B, align) * align

    # 2 inputs x 2 pipeline buffers x tb x D x itemsize <= ~24 MiB
    tile_budget = 24 * 1024 * 1024
    per_row = 2 * 2 * D * itemsize
    tb = max(align, (tile_budget // per_row) // align * align)
    tb = min(tb, b_ceil)

    # Keep at least 2 grid steps when the batch allows it so the "parallel"
    # dimension can be split across TensorCores on megacore parts.
    if b_ceil > align and pl.cdiv(b_ceil, tb) < 2:
        tb = max(align, pl.cdiv(pl.cdiv(b_ceil, 2), align) * align)
    return int(tb)


def similarity_forward(x1, x2, feature_weights, *, tb=None):
    """Pallas implementation of SimilarityModel.forward.

    x1, x2: [B, D]; feature_weights: [D]. Returns [B] float32 cosine similarities.
    """
    B, D = x1.shape
    assert x2.shape == (B, D)
    assert feature_weights.shape == (D,)

    itemsize = jnp.dtype(x1.dtype).itemsize
    if tb is None:
        tb = _choose_tile(B, D, itemsize)

    # Pad the batch to a multiple of the row tile (zero rows are harmless:
    # the eps clamps keep them finite, and they are sliced off below).
    n_blocks = pl.cdiv(B, tb)
    B_pad = int(n_blocks) * tb
    if B_pad != B:
        pad = B_pad - B
        x1 = jnp.pad(x1, ((0, pad), (0, 0)))
        x2 = jnp.pad(x2, ((0, pad), (0, 0)))

    # Only w^2 ever enters the math; precompute it once on the host side.
    wsq = (feature_weights.astype(jnp.float32) ** 2).reshape(1, D)

    # VMEM budget: double-buffered x1/x2 tiles + weights + output + slack.
    tile_bytes = 2 * 2 * tb * D * itemsize + 2 * D * 4 + 2 * tb * 4
    vmem_limit = int(min(max(tile_bytes + (8 << 20), 16 << 20), 48 << 20))

    out = pl.pallas_call(
        _similarity_kernel,
        out_shape=jax.ShapeDtypeStruct((B_pad, 1), jnp.float32),
        grid_spec=pltpu.PrefetchScalarGridSpec(
            num_scalar_prefetch=0,
            grid=(B_pad // tb,),
            in_specs=[
                pl.BlockSpec((tb, D), lambda i: (i, 0)),   # x1 row tile
                pl.BlockSpec((tb, D), lambda i: (i, 0)),   # x2 row tile
                pl.BlockSpec((1, D), lambda i: (0, 0)),    # shared w^2
            ],
            out_specs=pl.BlockSpec((tb, 1), lambda i: (i, 0)),
        ),
        compiler_params=pltpu.CompilerParams(
            dimension_semantics=("parallel",),
            vmem_limit_bytes=vmem_limit,
        ),
    )(x1, x2, wsq)
    return out[:B, 0]


def similarity_ref(x1, x2, feature_weights):
    """Pure-JAX reference matching PyTorch semantics."""
    x1 = x1.astype(jnp.float32)
    x2 = x2.astype(jnp.float32)
    n1 = jnp.maximum(jnp.linalg.norm(x1, axis=-1, keepdims=True), _NORM_EPS)
    n2 = jnp.maximum(jnp.linalg.norm(x2, axis=-1, keepdims=True), _NORM_EPS)
    w1 = (x1 / n1) * feature_weights
    w2 = (x2 / n2) * feature_weights
    num = jnp.sum(w1 * w2, axis=-1)
    den = jnp.maximum(
        jnp.linalg.norm(w1, axis=-1) * jnp.linalg.norm(w2, axis=-1), _COS_EPS
    )
    return num / den


if __name__ == "__main__":
    B, D = 16, 32  # batch, total_feature_dim

    key = jax.random.PRNGKey(0)
    k1, k2, kw = jax.random.split(key, 3)
    x1 = jax.random.normal(k1, (B, D), dtype=jnp.float32)
    x2 = jax.random.normal(k2, (B, D), dtype=jnp.float32)
    # nn.Parameter(torch.randn(total_feature_dim)) -> deterministic synthetic init
    feature_weights = jax.random.normal(kw, (D,), dtype=jnp.float32)

    out = similarity_forward(x1, x2, feature_weights)
    out = jax.block_until_ready(out)

    ref = similarity_ref(x1, x2, feature_weights)
    assert out.shape == (B,)
    assert jnp.allclose(out, ref, atol=1e-5, rtol=1e-5), (out, ref)

    print("KERNEL_OK")
</pallas_src>

<mosaic_0001>
module attributes {stable_mosaic.version = 11 : i64} {
  func.func @_similarity_kernel(%arg0: i32, %arg1: memref<8x32xf32, #tpu.memory_space<vmem>>, %arg2: memref<8x32xf32, #tpu.memory_space<vmem>>, %arg3: memref<1x32xf32, #tpu.memory_space<vmem>>, %arg4: memref<8x1xf32, #tpu.memory_space<vmem>>) attributes {dimension_semantics = [#tpu.dimension_semantics<parallel>], iteration_bounds = array<i64: 2>, scalar_prefetch = 0 : i64, scratch_operands = 0 : i64, tpu.core_type = #tpu.core_type<tc>, window_params = [{transform_indices = @transform_0, window_bounds = array<i64: 8, 32>}, {transform_indices = @transform_1, window_bounds = array<i64: 8, 32>}, {pipeline_mode = #tpu.pipeline_mode<synchronous>, transform_indices = @transform_2, window_bounds = array<i64: 1, 32>}, {transform_indices = @transform_3, window_bounds = array<i64: 8, 1>}]} {
    %c0 = arith.constant 0 : index
    %c0_0 = arith.constant 0 : index
    %0 = vector.load %arg1[%c0, %c0_0] : memref<8x32xf32, #tpu.memory_space<vmem>>, vector<8x32xf32>
    %c0_1 = arith.constant 0 : index
    %c0_2 = arith.constant 0 : index
    %1 = vector.load %arg2[%c0_1, %c0_2] : memref<8x32xf32, #tpu.memory_space<vmem>>, vector<8x32xf32>
    %c0_3 = arith.constant 0 : index
    %c0_4 = arith.constant 0 : index
    %2 = vector.load %arg3[%c0_3, %c0_4] : memref<1x32xf32, #tpu.memory_space<vmem>>, vector<1x32xf32>
    %3 = arith.mulf %0, %0 : vector<8x32xf32>
    %4 = arith.mulf %1, %1 : vector<8x32xf32>
    %5 = arith.mulf %0, %1 : vector<8x32xf32>
    %cst = arith.constant dense<0.000000e+00> : vector<8xf32>
    %6 = vector.multi_reduction <add>, %3, %cst [1] : vector<8x32xf32> to vector<8xf32>
    %7 = vector.shape_cast %6 : vector<8xf32> to vector<8x1xf32>
    %cst_5 = arith.constant dense<0.000000e+00> : vector<8xf32>
    %8 = vector.multi_reduction <add>, %4, %cst_5 [1] : vector<8x32xf32> to vector<8xf32>
    %9 = vector.shape_cast %8 : vector<8xf32> to vector<8x1xf32>
    %10 = vector.broadcast %2 : vector<1x32xf32> to vector<8x32xf32>
    %11 = arith.mulf %3, %10 : vector<8x32xf32>
    %cst_6 = arith.constant dense<0.000000e+00> : vector<8xf32>
    %12 = vector.multi_reduction <add>, %11, %cst_6 [1] : vector<8x32xf32> to vector<8xf32>
    %13 = vector.shape_cast %12 : vector<8xf32> to vector<8x1xf32>
    %14 = vector.broadcast %2 : vector<1x32xf32> to vector<8x32xf32>
    %15 = arith.mulf %4, %14 : vector<8x32xf32>
    %cst_7 = arith.constant dense<0.000000e+00> : vector<8xf32>
    %16 = vector.multi_reduction <add>, %15, %cst_7 [1] : vector<8x32xf32> to vector<8xf32>
    %17 = vector.shape_cast %16 : vector<8xf32> to vector<8x1xf32>
    %18 = vector.broadcast %2 : vector<1x32xf32> to vector<8x32xf32>
    %19 = arith.mulf %5, %18 : vector<8x32xf32>
    %cst_8 = arith.constant dense<0.000000e+00> : vector<8xf32>
    %20 = vector.multi_reduction <add>, %19, %cst_8 [1] : vector<8x32xf32> to vector<8xf32>
    %21 = vector.shape_cast %20 : vector<8xf32> to vector<8x1xf32>
    %cst_9 = arith.constant 1.000000e-24 : f32
    %22 = vector.broadcast %cst_9 : f32 to vector<8x1xf32>
    %23 = arith.maximumf %7, %22 : vector<8x1xf32>
    %24 = math.rsqrt %23 : vector<8x1xf32>
    %cst_10 = arith.constant 1.000000e-24 : f32
    %25 = vector.broadcast %cst_10 : f32 to vector<8x1xf32>
    %26 = arith.maximumf %9, %25 : vector<8x1xf32>
    %27 = math.rsqrt %26 : vector<8x1xf32>
    %28 = math.sqrt %13 : vector<8x1xf32>
    %29 = arith.mulf %24, %28 : vector<8x1xf32>
    %30 = math.sqrt %17 : vector<8x1xf32>
    %31 = arith.mulf %27, %30 : vector<8x1xf32>
    %32 = arith.mulf %24, %27 : vector<8x1xf32>
    %33 = arith.mulf %32, %21 : vector<8x1xf32>
    %34 = arith.mulf %29, %31 : vector<8x1xf32>
    %cst_11 = arith.constant 9.99999993E-9 : f32
    %35 = vector.broadcast %cst_11 : f32 to vector<8x1xf32>
    %36 = arith.maximumf %34, %35 : vector<8x1xf32>
    %37 = tpu.reciprocal %36 : vector<8x1xf32> -> vector<8x1xf32>
    %38 = arith.mulf %33, %37 : vector<8x1xf32>
    %c0_12 = arith.constant 0 : index
    %c0_13 = arith.constant 0 : index
    %39 = vector.load %arg4[%c0_12, %c0_13] : memref<8x1xf32, #tpu.memory_space<vmem>>, vector<8x1xf32>
    tpu.vector_store %arg4[%c0_12, %c0_13], %38 {strides = array<i32>} : memref<8x1xf32, #tpu.memory_space<vmem>>, vector<8x1xf32>,
    return
  }
  func.func @transform_0(%arg0: i32) -> (i32, i32) {
    %c0_i32 = arith.constant 0 : i32
    %c0_i32_0 = arith.constant 0 : i32
    return %arg0, %c0_i32 : i32, i32
  }
  func.func @transform_1(%arg0: i32) -> (i32, i32) {
    %c0_i32 = arith.constant 0 : i32
    %c0_i32_0 = arith.constant 0 : i32
    return %arg0, %c0_i32 : i32, i32
  }
  func.func @transform_2(%arg0: i32) -> (i32, i32) {
    %c0_i32 = arith.constant 0 : i32
    %c0_i32_0 = arith.constant 0 : i32
    %c0_i32_1 = arith.constant 0 : i32
    return %c0_i32, %c0_i32_0 : i32, i32
  }
  func.func @transform_3(%arg0: i32) -> (i32, i32) {
    %c0_i32 = arith.constant 0 : i32
    %c0_i32_0 = arith.constant 0 : i32
    return %arg0, %c0_i32 : i32, i32
  }
}

</mosaic_0001>

<llo_original>
// kernel: tpu_custom_call.1
$region0: #{tpu_custom_call.1}
  #allocation0 [shape = 'u32[]', space=smem, size = 0x4, offset = 0x4, fixed_abs, tag = 'smem constant byte address 0x4 - core index']
  #allocation1 [shape = 'u32[72,128]{1,0:T(1,128)}', space=vmem, size = 0x9000, scoped, tag = 'internal scratch']
  %s0 = inlined_call_operand.hbm [shape: f32[16,32], index: 0, kind: input, shape index: {}]
  %s1 = inlined_call_operand.hbm [shape: f32[16,32], index: 1, kind: input, shape index: {}]
  %s2 = inlined_call_operand.vmem [shape: f32[1,32], index: 2, kind: input, shape index: {}]
  %s3 = inlined_call_operand.vmem [shape: f32[16,1], index: 3, kind: output, shape index: {}]
  %s4 = sld [smem:[#allocation0]]
  $region53: #{tpu_custom_call.1} parent=0
    _
  %s6 = ssub.s32 1, %s4
  %s7 = scalar_select 0, %s6, %s4
  $region1: #{tpu_custom_call.1} parent=0
    #allocation2 [shape = 'u8[8192]{0}', space=vmem, size = 0x2000, scoped, tag = 'input window, operand 0']
    #allocation3 [shape = 's32[2]{0}', space=sflag, size = 0x8, scoped, tag = 'scoped memory for tpu_custom_call.1']
    #allocation4 [shape = 'u8[8192]{0}', space=vmem, size = 0x2000, scoped, tag = 'input window, operand 1']
    #allocation5 [shape = 's32[2]{0}', space=sflag, size = 0x8, scoped, tag = 'scoped memory for tpu_custom_call.1']
    %8 = vsyncpa [#allocation3], 0
    %s9 = scalar_lea.sflag [#allocation3], 1
    %10 = vsyncpa %s9, 0
    %11 = vsyncpa [#allocation5], 0
    %s12 = scalar_lea.sflag [#allocation5], 1
    %13 = vsyncpa %s12, 0
    loop: start=0, step=1, limit=4
    $region2: #{tpu_custom_call.1} parent=1 // loop_pre_header
      _
    $region3: #{tpu_custom_call.1} parent=1 // loop_header
      %s15 = sphi 0, %s19
      %p16 = scmp.ge.s32.totalorder %s15, 4
      %s25 = sphi 0, %s27
      %s28 = sphi 0, %s25
      %s29 = sphi 0, %s28
      %s45 = sphi 0, %s29
      %s51 = sphi 0, %s53
      %s54 = sphi 0, %s51
      %s55 = sphi 0, %s54
      %s71 = sphi 0, %s55
      %s75 = sphi 0, %s75
      %s77 = sphi 0, %s75
      %s78 = sphi 0, %s77
      %s92 = sphi 0, %s78
      %s98 = sphi 0, %s100
      %s101 = sphi 0, %s98
      %s102 = sphi 0, %s101
      %s118 = sphi 0, %s102
    $region4: #{tpu_custom_call.1} parent=1 // loop_header_branch
      %18 = sbr.rel (%p16) target = $region8
    $region5: #{tpu_custom_call.1} parent=1 // loop_body
      %s20 = ssub.s32 %s15, 1
      %s21 = ssub.s32 %s15, 2
      %s22 = sadd.s32 %s15, 1
      %s23 = ssub.s32 %s15, %s22
      %p24 = scmp.eq.s32.totalorder %s23, 0
      %s26 = sadd.s32 %s25, 1
      %s27 = scalar_select %p24, %s25, %s26
      %p30 = pneg %p24
      %p31 = scmp.eq.s32.totalorder %s15, 1
      %p32 = por %p30, %p31
      %p33 = scmp.ne.s32.totalorder %s25, %s28
      %p34 = scmp.eq.s32.totalorder %s15, 0
      %p35 = por %p33, %p34
      %p36 = scmp.ne.s32.totalorder %s25, %s28
      %p37 = scmp.eq.s32.totalorder %s20, 1
      %p38 = por %p36, %p37
      %p39 = scmp.ne.s32.totalorder %s28, %s29
      %p40 = scmp.eq.s32.totalorder %s20, 0
      %p41 = por %p39, %p40
      %p42 = scmp.ne.s32.totalorder %s28, %s29
      %p43 = scmp.eq.s32.totalorder %s21, 1
      %p44 = por %p42, %p43
      %p46 = scmp.ne.s32.totalorder %s29, %s45
      %p47 = scmp.eq.s32.totalorder %s21, 0
      %p48 = por %p46, %p47
      %s49 = ssub.s32 %s15, %s22
      %p50 = scmp.eq.s32.totalorder %s49, 0
      %s52 = sadd.s32 %s51, 1
      %s53 = scalar_select %p50, %s51, %s52
      %p56 = pneg %p50
      %p57 = scmp.eq.s32.totalorder %s15, 1
      %p58 = por %p56, %p57
      %p59 = scmp.ne.s32.totalorder %s51, %s54
      %p60 = scmp.eq.s32.totalorder %s15, 0
      %p61 = por %p59, %p60
      %p62 = scmp.ne.s32.totalorder %s51, %s54
      %p63 = scmp.eq.s32.totalorder %s20, 1
      %p64 = por %p62, %p63
      %p65 = scmp.ne.s32.totalorder %s54, %s55
      %p66 = scmp.eq.s32.totalorder %s20, 0
      %p67 = por %p65, %p66
      %p68 = scmp.ne.s32.totalorder %s54, %s55
      %p69 = scmp.eq.s32.totalorder %s21, 1
      %p70 = por %p68, %p69
      %p72 = scmp.ne.s32.totalorder %s55, %s71
      %p73 = scmp.eq.s32.totalorder %s21, 0
      %p74 = por %p72, %p73
      %s76 = sadd.s32 %s75, 1
      %p79 = scmp.eq.s32.totalorder %s15, 1
      %p80 = scmp.ne.s32.totalorder %s75, %s77
      %p81 = scmp.eq.s32.totalorder %s15, 0
      %p82 = por %p80, %p81
      %p83 = scmp.ne.s32.totalorder %s75, %s77
      %p84 = scmp.eq.s32.totalorder %s20, 1
      %p85 = por %p83, %p84
      %p86 = scmp.ne.s32.totalorder %s77, %s78
      %p87 = scmp.eq.s32.totalorder %s20, 0
      %p88 = por %p86, %p87
      %p89 = scmp.ne.s32.totalorder %s77, %s78
      %p90 = scmp.eq.s32.totalorder %s21, 1
      %p91 = por %p89, %p90
      %p93 = scmp.ne.s32.totalorder %s78, %s92
      %p94 = scmp.eq.s32.totalorder %s21, 0
      %p95 = por %p93, %p94
      %s96 = ssub.s32 %s15, %s22
      %p97 = scmp.eq.s32.totalorder %s96, 0
      %s99 = sadd.s32 %s98, 1
      %s100 = scalar_select %p97, %s98, %s99
      %p103 = pneg %p97
      %p104 = scmp.eq.s32.totalorder %s15, 1
      %p105 = por %p103, %p104
      %p106 = scmp.ne.s32.totalorder %s98, %s101
      %p107 = scmp.eq.s32.totalorder %s15, 0
      %p108 = por %p106, %p107
      %p109 = scmp.ne.s32.totalorder %s98, %s101
      %p110 = scmp.eq.s32.totalorder %s20, 1
      %p111 = por %p109, %p110
      %p112 = scmp.ne.s32.totalorder %s101, %s102
      %p113 = scmp.eq.s32.totalorder %s20, 0
      %p114 = por %p112, %p113
      %p115 = scmp.ne.s32.totalorder %s101, %s102
      %p116 = scmp.eq.s32.totalorder %s21, 1
      %p117 = por %p115, %p116
      %p119 = scmp.ne.s32.totalorder %s102, %s118
      %p120 = scmp.eq.s32.totalorder %s21, 0
      %p121 = por %p119, %p120
      %p122 = scmp.le.s32.totalorder 1, %s15
      %p123 = scmp.lt.s32.totalorder %s15, 3
      %p124 = pnand %p122, %p123
      %p125 = pneg %p124
      // Predicated region
      $region9: #{tpu_custom_call.1} parent=5 // pred_check
        _
      $region10: #{tpu_custom_call.1} parent=5 // pred_check_branch
        %127 = sbr.rel (%p124) target = $region12
      $region11: #{tpu_custom_call.1} parent=5 // pred_region
        %s128 = ssub.s32 %s15, 1
        // Predicated region
        $region13: #{tpu_custom_call.1} parent=11 // pred_check
          %p129 = pneg %p88
        $region14: #{tpu_custom_call.1} parent=11 // pred_check_branch
          %131 = sbr.rel (%p129) target = $region16
        $region15: #{tpu_custom_call.1} parent=11 // pred_region
          _
        $region16: #{tpu_custom_call.1} parent=11 // pred_fallthru
          _
      $region12: #{tpu_custom_call.1} parent=5 // pred_fallthru
        _
      %p132 = scmp.lt.s32.totalorder %s15, 2
      // Predicated region
      $region17: #{tpu_custom_call.1} parent=5 // pred_check
        %p133 = pneg %p132
      $region18: #{tpu_custom_call.1} parent=5 // pred_check_branch
        %135 = sbr.rel (%p133) target = $region20
      $region19: #{tpu_custom_call.1} parent=5 // pred_region
        // Predicated region
        $region21: #{tpu_custom_call.1} parent=19 // pred_check
          %p136 = pneg %p35
        $region22: #{tpu_custom_call.1} parent=19 // pred_check_branch
          %138 = sbr.rel (%p136) target = $region24
        $region23: #{tpu_custom_call.1} parent=19 // pred_region
          %s139 = sand.u32 %s25, 1
          %s140 = scalar_lea.sflag [#allocation3], %s139
          %s141 = sand.u32 %s25, 1
          %s142 = smul.addr %s141, 8
          %s143 = scalar_lea.vmem [#allocation2], %s142
          %145 = vsyncadd %s140, 0
          %s146 = smul.addr %s15, 8
          %s147 = scalar_lea.hbm %s0, %s146
          %s149 = sshll.u32 %s147, 4
          %s150 = int_to_ptr.hbm [resolvable:$true] %s149
          %s151 = sshll.u32 %s143, 4
          %s152 = int_to_ptr.vmem [resolvable:$true] %s151
          %154 = dma.hbm_to_vmem [thread:$0]  %s150, 128, %s152, %s140
        $region24: #{tpu_custom_call.1} parent=19 // pred_fallthru
          _
        // Predicated region
        $region25: #{tpu_custom_call.1} parent=19 // pred_check
          %p155 = pneg %p61
        $region26: #{tpu_custom_call.1} parent=19 // pred_check_branch
          %157 = sbr.rel (%p155) target = $region28
        $region27: #{tpu_custom_call.1} parent=19 // pred_region
          %s158 = sand.u32 %s51, 1
          %s159 = scalar_lea.sflag [#allocation5], %s158
          %s160 = sand.u32 %s51, 1
          %s161 = smul.addr %s160, 8
          %s162 = scalar_lea.vmem [#allocation4], %s161
          %164 = vsyncadd %s159, 0
          %s165 = smul.addr %s15, 8
          %s166 = scalar_lea.hbm %s1, %s165
          %s168 = sshll.u32 %s166, 4
          %s169 = int_to_ptr.hbm [resolvable:$true] %s168
          %s170 = sshll.u32 %s162, 4
          %s171 = int_to_ptr.vmem [resolvable:$true] %s170
          %173 = dma.hbm_to_vmem [thread:$0]  %s169, 128, %s171, %s159
        $region28: #{tpu_custom_call.1} parent=19 // pred_fallthru
          _
      $region20: #{tpu_custom_call.1} parent=5 // pred_fallthru
        _
      %p174 = scmp.le.s32.totalorder 1, %s15
      %p175 = scmp.lt.s32.totalorder %s15, 3
      %p176 = pnand %p174, %p175
      %p177 = pneg %p176
      // Predicated region
      $region29: #{tpu_custom_call.1} parent=5 // pred_check
        _
      $region30: #{tpu_custom_call.1} parent=5 // pred_check_branch
        %179 = sbr.rel (%p176) target = $region32
      $region31: #{tpu_custom_call.1} parent=5 // pred_region
        %s180 = ssub.s32 %s15, 1
        %s181 = sand.u32 %s28, 1
        %s182 = scalar_lea.sflag [#allocation3], %s181
        %s183 = sand.u32 %s28, 1
        %s184 = smul.addr %s183, 8
        %s185 = scalar_lea.vmem [#allocation2], %s184
        // Predicated region
        $region33: #{tpu_custom_call.1} parent=31 // pred_check
          %p186 = pneg %p41
        $region34: #{tpu_custom_call.1} parent=31 // pred_check_branch
          %188 = sbr.rel (%p186) target = $region36
        $region35: #{tpu_custom_call.1} parent=31 // pred_region
          %190 = dma.done %s182, 128
        $region36: #{tpu_custom_call.1} parent=31 // pred_fallthru
          _
        %s191 = sand.u32 %s54, 1
        %s192 = scalar_lea.sflag [#allocation5], %s191
        %s193 = sand.u32 %s54, 1
        %s194 = smul.addr %s193, 8
        %s195 = scalar_lea.vmem [#allocation4], %s194
        // Predicated region
        $region37: #{tpu_custom_call.1} parent=31 // pred_check
          %p196 = pneg %p67
        $region38: #{tpu_custom_call.1} parent=31 // pred_check_branch
          %198 = sbr.rel (%p196) target = $region40
        $region39: #{tpu_custom_call.1} parent=31 // pred_region
          %200 = dma.done %s192, 128
        $region40: #{tpu_custom_call.1} parent=31 // pred_fallthru
          _
        %s201 = sand.u32 %s28, 1
        %s202 = scalar_lea.sflag [#allocation3], %s201
        %s203 = sand.u32 %s28, 1
        %s204 = smul.addr %s203, 8
        %s205 = scalar_lea.vmem [#allocation2], %s204
        %p206 = pneg %p41
        %p207 = pneg %p38
        %s208 = sand.u32 %s54, 1
        %s209 = scalar_lea.sflag [#allocation5], %s208
        %s210 = sand.u32 %s54, 1
        %s211 = smul.addr %s210, 8
        %s212 = scalar_lea.vmem [#allocation4], %s211
        %p213 = pneg %p67
        %p214 = pneg %p64
        %p215 = pneg %p88
        %p216 = pneg %p85
        %p217 = pneg %p114
        %p218 = pneg %p111
        %p219 = scmp.lt.s32.totalorder %s20, 1
        %s220 = scalar_select %p219, %s20, 1
        %s221 = smul.addr %s220, 8
        %s222 = scalar_lea.vmem %s3, %s221
        %p223 = scmp.lt.s32.totalorder %s20, 1
        %s224 = scalar_select %p223, %s20, 1
        %s225 = smul.addr %s224, 8
        %s226 = scalar_lea.vmem %s3, %s225
        %v227 = vld [vmem:[%s185] sm:$0xff]
        %v228 = vld [vmem:[%s195] sm:$0xff]
        %v229 = vld [vmem:[%s2] sm:$0x1]
        %v230 = vmul.f32 %v227, %v227
        %v231 = vmul.f32 %v228, %v228
        %v232 = vmul.f32 %v227, %v228
        %vm233 = vcmask 261120
        %v234 = vsel %vm233, %v230, 0.0
        %235 = vadd.xlane.f32.xlu0 %v234
        %v236 = vpop.xlane.xlu0 %235
        %v237 = vsel %vm233, %v231, 0.0
        %238 = vadd.xlane.f32.xlu0 %v237
        %v239 = vpop.xlane.xlu0 %238
        %v241 = vperm.slane %v229, 0
        %v243 = vmul.f32 %v230, %v241
        %v244 = vsel %vm233, %v243, 0.0
        %245 = vadd.xlane.f32.xlu0 %v244
        %v246 = vpop.xlane.xlu0 %245
        %v247 = vmul.f32 %v231, %v241
        %v248 = vsel %vm233, %v247, 0.0
        %249 = vadd.xlane.f32.xlu0 %v248
        %v250 = vpop.xlane.xlu0 %249
        %v251 = vmul.f32 %v232, %v241
        %v252 = vsel %vm233, %v251, 0.0
        %253 = vadd.xlane.f32.xlu0 %v252
        %v254 = vpop.xlane.xlu0 %253
        %v255 = vmax.f32 %v236, 1e-24
        %v256 = vrsqrt.pop %v255
        %v257 = vmul.f32 %v256, %v255
        %v258 = vmul.f32 %v257, %v256
        %v259 = vmul.f32 0.5, %v258
        %v260 = vsub.f32 1.5, %v259
        %v261 = vmul.f32 %v256, %v260
        %vm262 = vweird.f32 %v255
        %vm263 = vweird.f32 %v256
        %vm264 = vmor %vm262, %vm263
        %v265 = vsel %vm264, %v256, %v261
        %v266 = vmax.f32 %v239, 1e-24
        %v267 = vrsqrt.pop %v266
        %v268 = vmul.f32 %v267, %v266
        %v269 = vmul.f32 %v268, %v267
        %v270 = vmul.f32 0.5, %v269
        %v271 = vsub.f32 1.5, %v270
        %v272 = vmul.f32 %v267, %v271
        %vm273 = vweird.f32 %v266
        %vm274 = vweird.f32 %v267
        %vm275 = vmor %vm273, %vm274
        %v276 = vsel %vm275, %v267, %v272
        %v277 = vrsqrt.pop %v246
        %v278 = vmul.f32 %v277, %v246
        %v279 = vmul.f32 %v278, %v277
        %v280 = vmul.f32 0.5, %v279
        %v281 = vsub.f32 1.5, %v280
        %v282 = vmul.f32 %v277, %v281
        %v283 = vmul.f32 %v246, %v282
        %vm284 = vcmp.eq.f32.partialorder %v246, inf
        %v285 = vsel %vm284, %v246, %v283
        %vm286 = vcmp.eq.f32.partialorder %v246, 0.0
        %v287 = vand.u32 %v246, 2147483648
        %v288 = vsel %vm286, %v287, %v285
        %v289 = vmul.f32 %v265, %v288
        %v290 = vrsqrt.pop %v250
        %v291 = vmul.f32 %v290, %v250
        %v292 = vmul.f32 %v291, %v290
        %v293 = vmul.f32 0.5, %v292
        %v294 = vsub.f32 1.5, %v293
        %v295 = vmul.f32 %v290, %v294
        %v296 = vmul.f32 %v250, %v295
        %vm297 = vcmp.eq.f32.partialorder %v250, inf
        %v298 = vsel %vm297, %v250, %v296
        %vm299 = vcmp.eq.f32.partialorder %v250, 0.0
        %v300 = vand.u32 %v250, 2147483648
        %v301 = vsel %vm299, %v300, %v298
        %v302 = vmul.f32 %v276, %v301
        %v303 = vmul.f32 %v265, %v276
        %v304 = vmul.f32 %v303, %v254
        %v305 = vmul.f32 %v289, %v302
        %v306 = vmax.f32 %v305, 1e-08
        %v307 = vrcp.pop %v306
        %v308 = vmul.f32 %v306, %v307
        %v309 = vsub.f32 1.0, %v308
        %v310 = vmul.f32 %v307, %v309
        %v311 = vadd.f32 %v307, %v310
        %vm312 = vweird.f32 %v306
        %vm313 = vweird.f32 %v307
        %vm314 = vmor %vm312, %vm313
        %v315 = vsel %vm314, %v307, %v311
        %v316 = vand.u32 2147483647, %v306
        %vm317 = vcmp.eq.f32.partialorder %v316, 8.507059e+37
        %v318 = vand.u32 %v306, 2147483648
        %v319 = vor.u32 1.1754944e-38, %v318
        %v320 = vsel %vm317, %v319, %v315
        %v321 = vmul.f32 %v304, %v320
        %vm322 = vcmask 7168
        %323 = vst.msk [vmem:[%s226] sm:$0xff] %vm322, %v321
        %p324 = scmp.lt.s32.totalorder %s20, 1
        %s325 = scalar_select %p324, %s20, 1
        %s326 = smul.addr %s325, 8
        %s327 = scalar_lea.vmem %s3, %s326
        // Predicated region
        $region41: #{tpu_custom_call.1} parent=31 // pred_check
          %p328 = pneg %p111
        $region42: #{tpu_custom_call.1} parent=31 // pred_check_branch
          %330 = sbr.rel (%p328) target = $region44
        $region43: #{tpu_custom_call.1} parent=31 // pred_region
          _
        $region44: #{tpu_custom_call.1} parent=31 // pred_fallthru
          _
      $region32: #{tpu_custom_call.1} parent=5 // pred_fallthru
        _
      %p331 = scmp.le.s32.totalorder 2, %s15
      // Predicated region
      $region45: #{tpu_custom_call.1} parent=5 // pred_check
        %p332 = pneg %p331
      $region46: #{tpu_custom_call.1} parent=5 // pred_check_branch
        %334 = sbr.rel (%p332) target = $region48
      $region47: #{tpu_custom_call.1} parent=5 // pred_region
        %s335 = ssub.s32 %s15, 2
        // Predicated region
        $region49: #{tpu_custom_call.1} parent=47 // pred_check
          %p336 = pneg %p117
        $region50: #{tpu_custom_call.1} parent=47 // pred_check_branch
          %338 = sbr.rel (%p336) target = $region52
        $region51: #{tpu_custom_call.1} parent=47 // pred_region
          %p339 = scmp.lt.s32.totalorder %s21, 1
          %s340 = scalar_select %p339, %s21, 1
          %s341 = smul.addr %s340, 8
          %s342 = scalar_lea.vmem %s3, %s341
        $region52: #{tpu_custom_call.1} parent=47 // pred_fallthru
          _
      $region48: #{tpu_custom_call.1} parent=5 // pred_fallthru
        _
    $region6: #{tpu_custom_call.1} parent=1 // loop_footer
      %s19 = sadd.s32 1, %s15
    $region7: #{tpu_custom_call.1} parent=1 // loop_footer_branch
      %14 = sbr.rel target = $region3
    $region8: #{tpu_custom_call.1} parent=1 // loop_exit
      _
    %343 = vsyncpa [#allocation3], 1
    %s344 = scalar_lea.sflag [#allocation3], 1
    %345 = vsyncpa %s344, 1
    %346 = vsyncpa [#allocation5], 1
    %s347 = scalar_lea.sflag [#allocation5], 1
    %348 = vsyncpa %s347, 1

</llo_original>
